<compile_context>
chip_gen: v7x
topology: tpu7x:2x2x1
jax: 0.10.0
libtpu: 0.0.40
codegen_flags: <defaults>
</compile_context>

<pallas_src>
import functools

import jax
import jax.numpy as jnp
from jax.experimental import pallas as pl
from jax.experimental.pallas import tpu as pltpu

_LANES = 128


def _erm_bce_kernel(x_ref, y_ref, g_ref, loss_ref, acc_ref,
                    loss_sc, cor_sc, cnt_sc, *, n_groups, inv_n):
    i = pl.program_id(0)

    # ---- init resident accumulators on the first grid step ----
    @pl.when(i == 0)
    def _init():
        loss_sc[...] = jnp.zeros_like(loss_sc)
        cor_sc[...] = jnp.zeros_like(cor_sc)
        cnt_sc[...] = jnp.zeros_like(cnt_sc)

    x = x_ref[...]                          # (TILE_R, 128) f32 logits
    y = y_ref[...].astype(jnp.float32)      # bf16 -> f32 targets in {0,1}
    g = g_ref[...].astype(jnp.int32)        # int8 -> int32 group ids (-1 = pad)

    valid = (g >= 0).astype(jnp.float32)    # mask out padded tail

    # ---- BCE with logits (numerically stable), per-lane partial sums ----
    # loss_i = max(x,0) - x*y + log(1 + exp(-|x|))
    per_elem = (jnp.maximum(x, 0.0) - x * y
                + jnp.log1p(jnp.exp(-jnp.abs(x)))) * valid
    loss_sc[...] += jnp.sum(per_elem, axis=0, keepdims=True)          # (1, 128)

    # ---- per-group binary accuracy: per-lane partial counts ----
    correct = ((x > 0.0) == (y > 0.5)).astype(jnp.float32)
    for gi in range(n_groups):              # n_groups is small & static -> unrolled
        m = (g == gi).astype(jnp.float32)   # padded elements (g == -1) never match
        cnt_sc[pl.ds(gi, 1), :] += jnp.sum(m, axis=0, keepdims=True)
        cor_sc[pl.ds(gi, 1), :] += jnp.sum(correct * m, axis=0, keepdims=True)

    # ---- finalize: single cross-lane reduce + divides ----
    @pl.when(i == pl.num_programs(0) - 1)
    def _finalize():
        loss_ref[...] = jnp.sum(loss_sc[...], axis=1, keepdims=True) * inv_n
        cor_tot = jnp.sum(cor_sc[...], axis=1, keepdims=True)        # (n_groups, 1)
        cnt_tot = jnp.sum(cnt_sc[...], axis=1, keepdims=True)        # (n_groups, 1)
        acc_ref[...] = cor_tot / jnp.maximum(cnt_tot, 1.0)


def erm_bce_forward(x, y, group_ids, n_groups, tile_r=512):
    """Returns (loss, acc) just like ERM_BCE.forward in training mode.

    x, y: float [N] (logits / binary targets), group_ids: int [N].
    Any N is supported (inputs are padded to a whole number of tiles).
    tile_r must be a multiple of 32 (int8 sublane tiling).
    """
    assert tile_r % 32 == 0, "tile_r must be a multiple of 32 (int8 tiling)"
    assert n_groups <= 127, "group ids are shipped as int8"

    N = x.shape[0]
    tile_elems = tile_r * _LANES
    n_tiles = pl.cdiv(N, tile_elems)
    padded = n_tiles * tile_elems
    pad = padded - N

    # Narrow dtypes for the streamed inputs (HBM bandwidth is the bottleneck).
    x_p = jnp.pad(x.astype(jnp.float32), (0, pad))
    y_p = jnp.pad(y.astype(jnp.bfloat16), (0, pad))
    g_p = jnp.pad(group_ids.astype(jnp.int8), (0, pad), constant_values=-1)

    rows = n_tiles * tile_r
    x2 = x_p.reshape(rows, _LANES)
    y2 = y_p.reshape(rows, _LANES)
    g2 = g_p.reshape(rows, _LANES)

    loss, acc = pl.pallas_call(
        functools.partial(_erm_bce_kernel, n_groups=n_groups, inv_n=1.0 / N),
        out_shape=(
            jax.ShapeDtypeStruct((1, 1), jnp.float32),
            jax.ShapeDtypeStruct((n_groups, 1), jnp.float32),
        ),
        grid=(n_tiles,),
        in_specs=[
            pl.BlockSpec((tile_r, _LANES), lambda i: (i, 0)),
            pl.BlockSpec((tile_r, _LANES), lambda i: (i, 0)),
            pl.BlockSpec((tile_r, _LANES), lambda i: (i, 0)),
        ],
        out_specs=(
            pl.BlockSpec((1, 1), lambda i: (0, 0)),
            pl.BlockSpec((n_groups, 1), lambda i: (0, 0)),
        ),
        scratch_shapes=[
            pltpu.VMEM((1, _LANES), jnp.float32),         # loss partials
            pltpu.VMEM((n_groups, _LANES), jnp.float32),  # correct partials
            pltpu.VMEM((n_groups, _LANES), jnp.float32),  # count partials
        ],
        compiler_params=pltpu.CompilerParams(
            dimension_semantics=("arbitrary",)),
    )(x2, y2, g2)

    return loss[0, 0], acc[:, 0]


def _reference(x, y, group_ids, n_groups):
    """Plain-JAX reference for verification."""
    per_elem = (jnp.maximum(x, 0.0) - x * y
                + jnp.log1p(jnp.exp(-jnp.abs(x))))
    loss = jnp.mean(per_elem)
    correct = ((x > 0.0) == (y > 0.5)).astype(jnp.float32)
    accs = []
    for gi in range(n_groups):
        m = (group_ids == gi).astype(jnp.float32)
        accs.append(jnp.sum(correct * m) / jnp.maximum(jnp.sum(m), 1.0))
    return loss, jnp.stack(accs)


if __name__ == "__main__":
    key = jax.random.PRNGKey(0)
    k1, k2, k3 = jax.random.split(key, 3)

    N = 10_000          # samples (exercises padding + multi-tile accumulation)
    n_groups = 4

    x = jax.random.normal(k1, (N,), dtype=jnp.float32)            # logits
    y = jax.random.bernoulli(k2, 0.5, (N,)).astype(jnp.float32)   # targets {0,1}
    group_ids = jax.random.randint(k3, (N,), 0, n_groups, dtype=jnp.int32)

    # Small tile so the example runs a 3-step grid; production default is 512.
    loss, acc = erm_bce_forward(x, y, group_ids, n_groups, tile_r=32)
    loss = jax.block_until_ready(loss)
    acc = jax.block_until_ready(acc)

    ref_loss, ref_acc = _reference(x, y, group_ids, n_groups)
    assert jnp.allclose(loss, ref_loss, atol=1e-5, rtol=1e-5), (loss, ref_loss)
    assert jnp.allclose(acc, ref_acc, atol=1e-5, rtol=1e-5), (acc, ref_acc)

    print("KERNEL_OK")
</pallas_src>

<mosaic_0001>
module attributes {stable_mosaic.version = 11 : i64} {
  func.func @_erm_bce_kernel(%arg0: i32, %arg1: memref<32x128xf32, #tpu.memory_space<vmem>>, %arg2: memref<32x128xbf16, #tpu.memory_space<vmem>>, %arg3: memref<32x128xi8, #tpu.memory_space<vmem>>, %arg4: memref<1x1xf32, #tpu.memory_space<vmem>>, %arg5: memref<4x1xf32, #tpu.memory_space<vmem>>, %arg6: memref<1x128xf32, #tpu.memory_space<vmem>>, %arg7: memref<4x128xf32, #tpu.memory_space<vmem>>, %arg8: memref<4x128xf32, #tpu.memory_space<vmem>>) attributes {dimension_semantics = [#tpu.dimension_semantics<arbitrary>], iteration_bounds = array<i64: 3>, scalar_prefetch = 0 : i64, scratch_operands = 3 : i64, tpu.core_type = #tpu.core_type<tc>, window_params = [{transform_indices = @transform_0, window_bounds = array<i64: 32, 128>}, {transform_indices = @transform_1, window_bounds = array<i64: 32, 128>}, {transform_indices = @transform_2, window_bounds = array<i64: 32, 128>}, {pipeline_mode = #tpu.pipeline_mode<synchronous>, transform_indices = @transform_3, window_bounds = array<i64: 1, 1>}, {pipeline_mode = #tpu.pipeline_mode<synchronous>, transform_indices = @transform_4, window_bounds = array<i64: 4, 1>}]} {
    %c0_i32 = arith.constant 0 : i32
    %0 = arith.cmpi eq, %arg0, %c0_i32 : i32
    %1 = arith.extui %0 : i1 to i32
    %c0_i32_0 = arith.constant 0 : i32
    %2 = arith.cmpi ne, %1, %c0_i32_0 : i32
    scf.if %2 {
      %cst_56 = arith.constant 0.000000e+00 : f32
      %99 = vector.broadcast %cst_56 : f32 to vector<1x128xf32>
      %c0_57 = arith.constant 0 : index
      %c0_58 = arith.constant 0 : index
      %100 = vector.load %arg6[%c0_57, %c0_58] : memref<1x128xf32, #tpu.memory_space<vmem>>, vector<1x128xf32>
      tpu.vector_store %arg6[%c0_57, %c0_58], %99 {strides = array<i32>} : memref<1x128xf32, #tpu.memory_space<vmem>>, vector<1x128xf32>,
      %cst_59 = arith.constant 0.000000e+00 : f32
      %101 = vector.broadcast %cst_59 : f32 to vector<4x128xf32>
      %c0_60 = arith.constant 0 : index
      %c0_61 = arith.constant 0 : index
      %102 = vector.load %arg7[%c0_60, %c0_61] : memref<4x128xf32, #tpu.memory_space<vmem>>, vector<4x128xf32>
      tpu.vector_store %arg7[%c0_60, %c0_61], %101 {strides = array<i32>} : memref<4x128xf32, #tpu.memory_space<vmem>>, vector<4x128xf32>,
      %cst_62 = arith.constant 0.000000e+00 : f32
      %103 = vector.broadcast %cst_62 : f32 to vector<4x128xf32>
      %c0_63 = arith.constant 0 : index
      %c0_64 = arith.constant 0 : index
      %104 = vector.load %arg8[%c0_63, %c0_64] : memref<4x128xf32, #tpu.memory_space<vmem>>, vector<4x128xf32>
      tpu.vector_store %arg8[%c0_63, %c0_64], %103 {strides = array<i32>} : memref<4x128xf32, #tpu.memory_space<vmem>>, vector<4x128xf32>,
    } else {
    }
    %c0 = arith.constant 0 : index
    %c0_1 = arith.constant 0 : index
    %3 = vector.load %arg1[%c0, %c0_1] : memref<32x128xf32, #tpu.memory_space<vmem>>, vector<32x128xf32>
    %c0_2 = arith.constant 0 : index
    %c0_3 = arith.constant 0 : index
    %4 = vector.load %arg2[%c0_2, %c0_3] : memref<32x128xbf16, #tpu.memory_space<vmem>>, vector<32x128xbf16>
    %5 = arith.extf %4 : vector<32x128xbf16> to vector<32x128xf32>
    %c0_4 = arith.constant 0 : index
    %c0_5 = arith.constant 0 : index
    %6 = vector.load %arg3[%c0_4, %c0_5] : memref<32x128xi8, #tpu.memory_space<vmem>>, vector<32x128xi8>
    %7 = arith.extsi %6 : vector<32x128xi8> to vector<32x128xi32>
    %c0_i32_6 = arith.constant 0 : i32
    %8 = vector.broadcast %c0_i32_6 : i32 to vector<32x128xi32>
    %9 = arith.cmpi sge, %7, %8 : vector<32x128xi32>
    %10 = arith.extui %9 : vector<32x128xi1> to vector<32x128xi32>
    %11 = arith.sitofp %10 : vector<32x128xi32> to vector<32x128xf32>
    %cst = arith.constant 0.000000e+00 : f32
    %12 = vector.broadcast %cst : f32 to vector<32x128xf32>
    %13 = arith.maximumf %3, %12 : vector<32x128xf32>
    %14 = arith.mulf %3, %5 : vector<32x128xf32>
    %15 = arith.subf %13, %14 : vector<32x128xf32>
    %16 = math.absf %3 : vector<32x128xf32>
    %cst_7 = arith.constant 0.000000e+00 : f32
    %17 = vector.broadcast %cst_7 : f32 to vector<32x128xf32>
    %18 = arith.subf %17, %16 : vector<32x128xf32>
    %19 = math.exp %18 : vector<32x128xf32>
    %20 = math.log1p %19 : vector<32x128xf32>
    %21 = arith.addf %15, %20 : vector<32x128xf32>
    %22 = arith.mulf %21, %11 : vector<32x128xf32>
    %c0_8 = arith.constant 0 : index
    %c0_9 = arith.constant 0 : index
    %23 = vector.load %arg6[%c0_8, %c0_9] : memref<1x128xf32, #tpu.memory_space<vmem>>, vector<1x128xf32>
    %cst_10 = arith.constant dense<0.000000e+00> : vector<128xf32>
    %24 = vector.multi_reduction <add>, %22, %cst_10 [0] : vector<32x128xf32> to vector<128xf32>
    %25 = vector.shape_cast %24 : vector<128xf32> to vector<1x128xf32>
    %26 = arith.addf %23, %25 : vector<1x128xf32>
    %c0_11 = arith.constant 0 : index
    %c0_12 = arith.constant 0 : index
    %27 = vector.load %arg6[%c0_11, %c0_12] : memref<1x128xf32, #tpu.memory_space<vmem>>, vector<1x128xf32>
    tpu.vector_store %arg6[%c0_11, %c0_12], %26 {strides = array<i32>} : memref<1x128xf32, #tpu.memory_space<vmem>>, vector<1x128xf32>,
    %cst_13 = arith.constant 0.000000e+00 : f32
    %28 = vector.broadcast %cst_13 : f32 to vector<32x128xf32>
    %29 = arith.cmpf ogt, %3, %28 : vector<32x128xf32>
    %cst_14 = arith.constant 5.000000e-01 : f32
    %30 = vector.broadcast %cst_14 : f32 to vector<32x128xf32>
    %31 = arith.cmpf ogt, %5, %30 : vector<32x128xf32>
    %32 = arith.xori %29, %31 : vector<32x128xi1>
    %cst_15 = arith.constant dense<true> : vector<32x128xi1>
    %33 = arith.xori %32, %cst_15 : vector<32x128xi1>
    %34 = arith.extui %33 : vector<32x128xi1> to vector<32x128xi32>
    %35 = arith.sitofp %34 : vector<32x128xi32> to vector<32x128xf32>
    %c0_i32_16 = arith.constant 0 : i32
    %36 = vector.broadcast %c0_i32_16 : i32 to vector<32x128xi32>
    %37 = arith.cmpi eq, %7, %36 : vector<32x128xi32>
    %38 = arith.extui %37 : vector<32x128xi1> to vector<32x128xi32>
    %39 = arith.sitofp %38 : vector<32x128xi32> to vector<32x128xf32>
    %c0_17 = arith.constant 0 : index
    %c0_18 = arith.constant 0 : index
    %40 = vector.load %arg8[%c0_17, %c0_18] : memref<4x128xf32, #tpu.memory_space<vmem>>, vector<1x128xf32>
    %cst_19 = arith.constant dense<0.000000e+00> : vector<128xf32>
    %41 = vector.multi_reduction <add>, %39, %cst_19 [0] : vector<32x128xf32> to vector<128xf32>
    %42 = vector.shape_cast %41 : vector<128xf32> to vector<1x128xf32>
    %43 = arith.addf %40, %42 : vector<1x128xf32>
    %c0_20 = arith.constant 0 : index
    %c0_21 = arith.constant 0 : index
    %44 = vector.load %arg8[%c0_20, %c0_21] : memref<4x128xf32, #tpu.memory_space<vmem>>, vector<1x128xf32>
    tpu.vector_store %arg8[%c0_20, %c0_21], %43 {strides = array<i32>} : memref<4x128xf32, #tpu.memory_space<vmem>>, vector<1x128xf32>,
    %c0_22 = arith.constant 0 : index
    %c0_23 = arith.constant 0 : index
    %45 = vector.load %arg7[%c0_22, %c0_23] : memref<4x128xf32, #tpu.memory_space<vmem>>, vector<1x128xf32>
    %46 = arith.mulf %35, %39 : vector<32x128xf32>
    %cst_24 = arith.constant dense<0.000000e+00> : vector<128xf32>
    %47 = vector.multi_reduction <add>, %46, %cst_24 [0] : vector<32x128xf32> to vector<128xf32>
    %48 = vector.shape_cast %47 : vector<128xf32> to vector<1x128xf32>
    %49 = arith.addf %45, %48 : vector<1x128xf32>
    %c0_25 = arith.constant 0 : index
    %c0_26 = arith.constant 0 : index
    %50 = vector.load %arg7[%c0_25, %c0_26] : memref<4x128xf32, #tpu.memory_space<vmem>>, vector<1x128xf32>
    tpu.vector_store %arg7[%c0_25, %c0_26], %49 {strides = array<i32>} : memref<4x128xf32, #tpu.memory_space<vmem>>, vector<1x128xf32>,
    %c1_i32 = arith.constant 1 : i32
    %51 = vector.broadcast %c1_i32 : i32 to vector<32x128xi32>
    %52 = arith.cmpi eq, %7, %51 : vector<32x128xi32>
    %53 = arith.extui %52 : vector<32x128xi1> to vector<32x128xi32>
    %54 = arith.sitofp %53 : vector<32x128xi32> to vector<32x128xf32>
    %c1 = arith.constant 1 : index
    %c0_27 = arith.constant 0 : index
    %55 = vector.load %arg8[%c1, %c0_27] : memref<4x128xf32, #tpu.memory_space<vmem>>, vector<1x128xf32>
    %cst_28 = arith.constant dense<0.000000e+00> : vector<128xf32>
    %56 = vector.multi_reduction <add>, %54, %cst_28 [0] : vector<32x128xf32> to vector<128xf32>
    %57 = vector.shape_cast %56 : vector<128xf32> to vector<1x128xf32>
    %58 = arith.addf %55, %57 : vector<1x128xf32>
    %c1_29 = arith.constant 1 : index
    %c0_30 = arith.constant 0 : index
    %59 = vector.load %arg8[%c1_29, %c0_30] : memref<4x128xf32, #tpu.memory_space<vmem>>, vector<1x128xf32>
    tpu.vector_store %arg8[%c1_29, %c0_30], %58 {strides = array<i32>} : memref<4x128xf32, #tpu.memory_space<vmem>>, vector<1x128xf32>,
    %c1_31 = arith.constant 1 : index
    %c0_32 = arith.constant 0 : index
    %60 = vector.load %arg7[%c1_31, %c0_32] : memref<4x128xf32, #tpu.memory_space<vmem>>, vector<1x128xf32>
    %61 = arith.mulf %35, %54 : vector<32x128xf32>
    %cst_33 = arith.constant dense<0.000000e+00> : vector<128xf32>
    %62 = vector.multi_reduction <add>, %61, %cst_33 [0] : vector<32x128xf32> to vector<128xf32>
    %63 = vector.shape_cast %62 : vector<128xf32> to vector<1x128xf32>
    %64 = arith.addf %60, %63 : vector<1x128xf32>
    %c1_34 = arith.constant 1 : index
    %c0_35 = arith.constant 0 : index
    %65 = vector.load %arg7[%c1_34, %c0_35] : memref<4x128xf32, #tpu.memory_space<vmem>>, vector<1x128xf32>
    tpu.vector_store %arg7[%c1_34, %c0_35], %64 {strides = array<i32>} : memref<4x128xf32, #tpu.memory_space<vmem>>, vector<1x128xf32>,
    %c2_i32 = arith.constant 2 : i32
    %66 = vector.broadcast %c2_i32 : i32 to vector<32x128xi32>
    %67 = arith.cmpi eq, %7, %66 : vector<32x128xi32>
    %68 = arith.extui %67 : vector<32x128xi1> to vector<32x128xi32>
    %69 = arith.sitofp %68 : vector<32x128xi32> to vector<32x128xf32>
    %c2 = arith.constant 2 : index
    %c0_36 = arith.constant 0 : index
    %70 = vector.load %arg8[%c2, %c0_36] : memref<4x128xf32, #tpu.memory_space<vmem>>, vector<1x128xf32>
    %cst_37 = arith.constant dense<0.000000e+00> : vector<128xf32>
    %71 = vector.multi_reduction <add>, %69, %cst_37 [0] : vector<32x128xf32> to vector<128xf32>
    %72 = vector.shape_cast %71 : vector<128xf32> to vector<1x128xf32>
    %73 = arith.addf %70, %72 : vector<1x128xf32>
    %c2_38 = arith.constant 2 : index
    %c0_39 = arith.constant 0 : index
    %74 = vector.load %arg8[%c2_38, %c0_39] : memref<4x128xf32, #tpu.memory_space<vmem>>, vector<1x128xf32>
    tpu.vector_store %arg8[%c2_38, %c0_39], %73 {strides = array<i32>} : memref<4x128xf32, #tpu.memory_space<vmem>>, vector<1x128xf32>,
    %c2_40 = arith.constant 2 : index
    %c0_41 = arith.constant 0 : index
    %75 = vector.load %arg7[%c2_40, %c0_41] : memref<4x128xf32, #tpu.memory_space<vmem>>, vector<1x128xf32>
    %76 = arith.mulf %35, %69 : vector<32x128xf32>
    %cst_42 = arith.constant dense<0.000000e+00> : vector<128xf32>
    %77 = vector.multi_reduction <add>, %76, %cst_42 [0] : vector<32x128xf32> to vector<128xf32>
    %78 = vector.shape_cast %77 : vector<128xf32> to vector<1x128xf32>
    %79 = arith.addf %75, %78 : vector<1x128xf32>
    %c2_43 = arith.constant 2 : index
    %c0_44 = arith.constant 0 : index
    %80 = vector.load %arg7[%c2_43, %c0_44] : memref<4x128xf32, #tpu.memory_space<vmem>>, vector<1x128xf32>
    tpu.vector_store %arg7[%c2_43, %c0_44], %79 {strides = array<i32>} : memref<4x128xf32, #tpu.memory_space<vmem>>, vector<1x128xf32>,
    %c3_i32 = arith.constant 3 : i32
    %81 = vector.broadcast %c3_i32 : i32 to vector<32x128xi32>
    %82 = arith.cmpi eq, %7, %81 : vector<32x128xi32>
    %83 = arith.extui %82 : vector<32x128xi1> to vector<32x128xi32>
    %84 = arith.sitofp %83 : vector<32x128xi32> to vector<32x128xf32>
    %c3 = arith.constant 3 : index
    %c0_45 = arith.constant 0 : index
    %85 = vector.load %arg8[%c3, %c0_45] : memref<4x128xf32, #tpu.memory_space<vmem>>, vector<1x128xf32>
    %cst_46 = arith.constant dense<0.000000e+00> : vector<128xf32>
    %86 = vector.multi_reduction <add>, %84, %cst_46 [0] : vector<32x128xf32> to vector<128xf32>
    %87 = vector.shape_cast %86 : vector<128xf32> to vector<1x128xf32>
    %88 = arith.addf %85, %87 : vector<1x128xf32>
    %c3_47 = arith.constant 3 : index
    %c0_48 = arith.constant 0 : index
    %89 = vector.load %arg8[%c3_47, %c0_48] : memref<4x128xf32, #tpu.memory_space<vmem>>, vector<1x128xf32>
    tpu.vector_store %arg8[%c3_47, %c0_48], %88 {strides = array<i32>} : memref<4x128xf32, #tpu.memory_space<vmem>>, vector<1x128xf32>,
    %c3_49 = arith.constant 3 : index
    %c0_50 = arith.constant 0 : index
    %90 = vector.load %arg7[%c3_49, %c0_50] : memref<4x128xf32, #tpu.memory_space<vmem>>, vector<1x128xf32>
    %91 = arith.mulf %35, %84 : vector<32x128xf32>
    %cst_51 = arith.constant dense<0.000000e+00> : vector<128xf32>
    %92 = vector.multi_reduction <add>, %91, %cst_51 [0] : vector<32x128xf32> to vector<128xf32>
    %93 = vector.shape_cast %92 : vector<128xf32> to vector<1x128xf32>
    %94 = arith.addf %90, %93 : vector<1x128xf32>
    %c3_52 = arith.constant 3 : index
    %c0_53 = arith.constant 0 : index
    %95 = vector.load %arg7[%c3_52, %c0_53] : memref<4x128xf32, #tpu.memory_space<vmem>>, vector<1x128xf32>
    tpu.vector_store %arg7[%c3_52, %c0_53], %94 {strides = array<i32>} : memref<4x128xf32, #tpu.memory_space<vmem>>, vector<1x128xf32>,
    %c2_i32_54 = arith.constant 2 : i32
    %96 = arith.cmpi eq, %arg0, %c2_i32_54 : i32
    %97 = arith.extui %96 : i1 to i32
    %c0_i32_55 = arith.constant 0 : i32
    %98 = arith.cmpi ne, %97, %c0_i32_55 : i32
    scf.if %98 {
      %c0_56 = arith.constant 0 : index
      %c0_57 = arith.constant 0 : index
      %99 = vector.load %arg6[%c0_56, %c0_57] : memref<1x128xf32, #tpu.memory_space<vmem>>, vector<1x128xf32>
      %cst_58 = arith.constant dense<0.000000e+00> : vector<1xf32>
      %100 = vector.multi_reduction <add>, %99, %cst_58 [1] : vector<1x128xf32> to vector<1xf32>
      %101 = vector.shape_cast %100 : vector<1xf32> to vector<1x1xf32>
      %cst_59 = arith.constant 9.99999974E-5 : f32
      %102 = vector.broadcast %cst_59 : f32 to vector<1x1xf32>
      %103 = arith.mulf %101, %102 : vector<1x1xf32>
      %c0_60 = arith.constant 0 : index
      %c0_61 = arith.constant 0 : index
      %104 = vector.load %arg4[%c0_60, %c0_61] : memref<1x1xf32, #tpu.memory_space<vmem>>, vector<1x1xf32>
      tpu.vector_store %arg4[%c0_60, %c0_61], %103 {strides = array<i32>} : memref<1x1xf32, #tpu.memory_space<vmem>>, vector<1x1xf32>,
      %c0_62 = arith.constant 0 : index
      %c0_63 = arith.constant 0 : index
      %105 = vector.load %arg7[%c0_62, %c0_63] : memref<4x128xf32, #tpu.memory_space<vmem>>, vector<4x128xf32>
      %cst_64 = arith.constant dense<0.000000e+00> : vector<4xf32>
      %106 = vector.multi_reduction <add>, %105, %cst_64 [1] : vector<4x128xf32> to vector<4xf32>
      %107 = vector.shape_cast %106 : vector<4xf32> to vector<4x1xf32>
      %c0_65 = arith.constant 0 : index
      %c0_66 = arith.constant 0 : index
      %108 = vector.load %arg8[%c0_65, %c0_66] : memref<4x128xf32, #tpu.memory_space<vmem>>, vector<4x128xf32>
      %cst_67 = arith.constant dense<0.000000e+00> : vector<4xf32>
      %109 = vector.multi_reduction <add>, %108, %cst_67 [1] : vector<4x128xf32> to vector<4xf32>
      %110 = vector.shape_cast %109 : vector<4xf32> to vector<4x1xf32>
      %cst_68 = arith.constant 1.000000e+00 : f32
      %111 = vector.broadcast %cst_68 : f32 to vector<4x1xf32>
      %112 = arith.maximumf %110, %111 : vector<4x1xf32>
      %113 = arith.divf %107, %112 : vector<4x1xf32>
      %c0_69 = arith.constant 0 : index
      %c0_70 = arith.constant 0 : index
      %114 = vector.load %arg5[%c0_69, %c0_70] : memref<4x1xf32, #tpu.memory_space<vmem>>, vector<4x1xf32>
      tpu.vector_store %arg5[%c0_69, %c0_70], %113 {strides = array<i32>} : memref<4x1xf32, #tpu.memory_space<vmem>>, vector<4x1xf32>,
    } else {
    }
    return
  }
  func.func @transform_0(%arg0: i32) -> (i32, i32) {
    %c0_i32 = arith.constant 0 : i32
    %c0_i32_0 = arith.constant 0 : i32
    return %arg0, %c0_i32 : i32, i32
  }
  func.func @transform_1(%arg0: i32) -> (i32, i32) {
    %c0_i32 = arith.constant 0 : i32
    %c0_i32_0 = arith.constant 0 : i32
    return %arg0, %c0_i32 : i32, i32
  }
  func.func @transform_2(%arg0: i32) -> (i32, i32) {
    %c0_i32 = arith.constant 0 : i32
    %c0_i32_0 = arith.constant 0 : i32
    return %arg0, %c0_i32 : i32, i32
  }
  func.func @transform_3(%arg0: i32) -> (i32, i32) {
    %c0_i32 = arith.constant 0 : i32
    %c0_i32_0 = arith.constant 0 : i32
    %c0_i32_1 = arith.constant 0 : i32
    return %c0_i32, %c0_i32_0 : i32, i32
  }
  func.func @transform_4(%arg0: i32) -> (i32, i32) {
    %c0_i32 = arith.constant 0 : i32
    %c0_i32_0 = arith.constant 0 : i32
    %c0_i32_1 = arith.constant 0 : i32
    return %c0_i32, %c0_i32_0 : i32, i32
  }
}

</mosaic_0001>

<llo_original>
// kernel: tpu_custom_call.1
$region0: #{tpu_custom_call.1}
  #allocation0 [shape = 'u32[]', space=smem, size = 0x4, offset = 0x4, fixed_abs, tag = 'smem constant byte address 0x4 - core index']
  #allocation1 [shape = 'u32[144,128]{1,0:T(1,128)}', space=vmem, size = 0x12000, scoped, tag = 'internal scratch']
  #allocation2 [shape = 'f32[1,128]{1,0:T(1,128)}', space=vmem, size = 0x200, scoped, tag = 'scratch operand']
  #allocation3 [shape = 'f32[4,128]{1,0:T(4,128)}', space=vmem, size = 0x800, scoped, tag = 'scratch operand']
  #allocation4 [shape = 'f32[4,128]{1,0:T(4,128)}', space=vmem, size = 0x800, scoped, tag = 'scratch operand']
  %s0 = inlined_call_operand.hbm [shape: f32[96,128], index: 0, kind: input, shape index: {}]
  %s1 = inlined_call_operand.hbm [shape: bf16[96,128], index: 1, kind: input, shape index: {}]
  %s2 = inlined_call_operand.hbm [shape: s8[96,128], index: 2, kind: input, shape index: {}]
  %s3 = inlined_call_operand.hbm [shape: f32[1,1], index: 3, kind: output, shape index: {0}]
  %s4 = inlined_call_operand.vmem [shape: f32[4,1], index: 4, kind: output, shape index: {1}]
  %5 = xla_tuple %s3, %s4
  %s6 = sld [smem:[#allocation0]]
  $region73: #{tpu_custom_call.1} parent=0
    _
  %s8 = ssub.s32 1, %s6
  %s9 = scalar_select 0, %s8, %s6
  $region1: #{tpu_custom_call.1} parent=0
    #allocation5 [shape = 'u8[32768]{0}', space=vmem, size = 0x8000, scoped, tag = 'input window, operand 0']
    #allocation6 [shape = 's32[2]{0}', space=sflag, size = 0x8, scoped, tag = 'scoped memory for tpu_custom_call.1']
    #allocation7 [shape = 's32[2]{0}', space=sflag, size = 0x8, scoped, tag = 'scoped memory for tpu_custom_call.1']
    #allocation8 [shape = 'u8[16384]{0}', space=vmem, size = 0x4000, scoped, tag = 'input window, operand 1']
    #allocation9 [shape = 's32[2]{0}', space=sflag, size = 0x8, scoped, tag = 'scoped memory for tpu_custom_call.1']
    #allocation10 [shape = 'u8[8192]{0}', space=vmem, size = 0x2000, scoped, tag = 'input window, operand 2']
    #allocation11 [shape = 'u8[512]{0}', space=vmem, size = 0x400, scoped, tag = 'output window, operand 0, single buffered']
    %10 = vsyncpa [#allocation6], 0
    %s11 = scalar_lea.sflag [#allocation6], 1
    %12 = vsyncpa %s11, 0
    %13 = vsyncpa [#allocation9], 0
    %s14 = scalar_lea.sflag [#allocation9], 1
    %15 = vsyncpa %s14, 0
    %16 = vsyncpa [#allocation7], 0
    loop: start=0, step=1, limit=5
    $region2: #{tpu_custom_call.1} parent=1 // loop_pre_header
      _
    $region3: #{tpu_custom_call.1} parent=1 // loop_header
      %s18 = sphi 0, %s22
      %p19 = scmp.ge.s32.totalorder %s18, 5
      %s28 = sphi 0, %s30
      %s31 = sphi 0, %s28
      %s32 = sphi 0, %s31
      %s48 = sphi 0, %s32
      %s54 = sphi 0, %s56
      %s57 = sphi 0, %s54
      %s58 = sphi 0, %s57
      %s74 = sphi 0, %s58
      %s80 = sphi 0, %s82
      %s83 = sphi 0, %s80
      %s84 = sphi 0, %s83
      %s100 = sphi 0, %s84
      %s104 = sphi 0, %s104
      %s106 = sphi 0, %s104
      %s107 = sphi 0, %s106
      %s121 = sphi 0, %s107
      %s125 = sphi 0, %s125
      %s127 = sphi 0, %s125
      %s128 = sphi 0, %s127
      %s142 = sphi 0, %s128
    $region4: #{tpu_custom_call.1} parent=1 // loop_header_branch
      %21 = sbr.rel (%p19) target = $region8
    $region5: #{tpu_custom_call.1} parent=1 // loop_body
      %s23 = ssub.s32 %s18, 1
      %s24 = ssub.s32 %s18, 2
      %s25 = sadd.s32 %s18, 1
      %s26 = ssub.s32 %s18, %s25
      %p27 = scmp.eq.s32.totalorder %s26, 0
      %s29 = sadd.s32 %s28, 1
      %s30 = scalar_select %p27, %s28, %s29
      %p33 = pneg %p27
      %p34 = scmp.eq.s32.totalorder %s18, 2
      %p35 = por %p33, %p34
      %p36 = scmp.ne.s32.totalorder %s28, %s31
      %p37 = scmp.eq.s32.totalorder %s18, 0
      %p38 = por %p36, %p37
      %p39 = scmp.ne.s32.totalorder %s28, %s31
      %p40 = scmp.eq.s32.totalorder %s23, 2
      %p41 = por %p39, %p40
      %p42 = scmp.ne.s32.totalorder %s31, %s32
      %p43 = scmp.eq.s32.totalorder %s23, 0
      %p44 = por %p42, %p43
      %p45 = scmp.ne.s32.totalorder %s31, %s32
      %p46 = scmp.eq.s32.totalorder %s24, 2
      %p47 = por %p45, %p46
      %p49 = scmp.ne.s32.totalorder %s32, %s48
      %p50 = scmp.eq.s32.totalorder %s24, 0
      %p51 = por %p49, %p50
      %s52 = ssub.s32 %s18, %s25
      %p53 = scmp.eq.s32.totalorder %s52, 0
      %s55 = sadd.s32 %s54, 1
      %s56 = scalar_select %p53, %s54, %s55
      %p59 = pneg %p53
      %p60 = scmp.eq.s32.totalorder %s18, 2
      %p61 = por %p59, %p60
      %p62 = scmp.ne.s32.totalorder %s54, %s57
      %p63 = scmp.eq.s32.totalorder %s18, 0
      %p64 = por %p62, %p63
      %p65 = scmp.ne.s32.totalorder %s54, %s57
      %p66 = scmp.eq.s32.totalorder %s23, 2
      %p67 = por %p65, %p66
      %p68 = scmp.ne.s32.totalorder %s57, %s58
      %p69 = scmp.eq.s32.totalorder %s23, 0
      %p70 = por %p68, %p69
      %p71 = scmp.ne.s32.totalorder %s57, %s58
      %p72 = scmp.eq.s32.totalorder %s24, 2
      %p73 = por %p71, %p72
      %p75 = scmp.ne.s32.totalorder %s58, %s74
      %p76 = scmp.eq.s32.totalorder %s24, 0
      %p77 = por %p75, %p76
      %s78 = ssub.s32 %s18, %s25
      %p79 = scmp.eq.s32.totalorder %s78, 0
      %s81 = sadd.s32 %s80, 1
      %s82 = scalar_select %p79, %s80, %s81
      %p85 = pneg %p79
      %p86 = scmp.eq.s32.totalorder %s18, 2
      %p87 = por %p85, %p86
      %p88 = scmp.ne.s32.totalorder %s80, %s83
      %p89 = scmp.eq.s32.totalorder %s18, 0
      %p90 = por %p88, %p89
      %p91 = scmp.ne.s32.totalorder %s80, %s83
      %p92 = scmp.eq.s32.totalorder %s23, 2
      %p93 = por %p91, %p92
      %p94 = scmp.ne.s32.totalorder %s83, %s84
      %p95 = scmp.eq.s32.totalorder %s23, 0
      %p96 = por %p94, %p95
      %p97 = scmp.ne.s32.totalorder %s83, %s84
      %p98 = scmp.eq.s32.totalorder %s24, 2
      %p99 = por %p97, %p98
      %p101 = scmp.ne.s32.totalorder %s84, %s100
      %p102 = scmp.eq.s32.totalorder %s24, 0
      %p103 = por %p101, %p102
      %s105 = sadd.s32 %s104, 1
      %p108 = scmp.eq.s32.totalorder %s18, 2
      %p109 = scmp.ne.s32.totalorder %s104, %s106
      %p110 = scmp.eq.s32.totalorder %s18, 0
      %p111 = por %p109, %p110
      %p112 = scmp.ne.s32.totalorder %s104, %s106
      %p113 = scmp.eq.s32.totalorder %s23, 2
      %p114 = por %p112, %p113
      %p115 = scmp.ne.s32.totalorder %s106, %s107
      %p116 = scmp.eq.s32.totalorder %s23, 0
      %p117 = por %p115, %p116
      %p118 = scmp.ne.s32.totalorder %s106, %s107
      %p119 = scmp.eq.s32.totalorder %s24, 2
      %p120 = por %p118, %p119
      %p122 = scmp.ne.s32.totalorder %s107, %s121
      %p123 = scmp.eq.s32.totalorder %s24, 0
      %p124 = por %p122, %p123
      %s126 = sadd.s32 %s125, 1
      %p129 = scmp.eq.s32.totalorder %s18, 2
      %p130 = scmp.ne.s32.totalorder %s125, %s127
      %p131 = scmp.eq.s32.totalorder %s18, 0
      %p132 = por %p130, %p131
      %p133 = scmp.ne.s32.totalorder %s125, %s127
      %p134 = scmp.eq.s32.totalorder %s23, 2
      %p135 = por %p133, %p134
      %p136 = scmp.ne.s32.totalorder %s127, %s128
      %p137 = scmp.eq.s32.totalorder %s23, 0
      %p138 = por %p136, %p137
      %p139 = scmp.ne.s32.totalorder %s127, %s128
      %p140 = scmp.eq.s32.totalorder %s24, 2
      %p141 = por %p139, %p140
      %p143 = scmp.ne.s32.totalorder %s128, %s142
      %p144 = scmp.eq.s32.totalorder %s24, 0
      %p145 = por %p143, %p144
      %p146 = scmp.le.s32.totalorder 1, %s18
      %p147 = scmp.lt.s32.totalorder %s18, 4
      %p148 = pnand %p146, %p147
      %p149 = pneg %p148
      // Predicated region
      $region9: #{tpu_custom_call.1} parent=5 // pred_check
        _
      $region10: #{tpu_custom_call.1} parent=5 // pred_check_branch
        %151 = sbr.rel (%p148) target = $region12
      $region11: #{tpu_custom_call.1} parent=5 // pred_region
        %s152 = ssub.s32 %s18, 1
      $region12: #{tpu_custom_call.1} parent=5 // pred_fallthru
        _
      %p153 = scmp.lt.s32.totalorder %s18, 3
      // Predicated region
      $region13: #{tpu_custom_call.1} parent=5 // pred_check
        %p154 = pneg %p153
      $region14: #{tpu_custom_call.1} parent=5 // pred_check_branch
        %156 = sbr.rel (%p154) target = $region16
      $region15: #{tpu_custom_call.1} parent=5 // pred_region
        // Predicated region
        $region17: #{tpu_custom_call.1} parent=15 // pred_check
          %p157 = pneg %p38
        $region18: #{tpu_custom_call.1} parent=15 // pred_check_branch
          %159 = sbr.rel (%p157) target = $region20
        $region19: #{tpu_custom_call.1} parent=15 // pred_region
          %s160 = sand.u32 %s28, 1
          %s161 = scalar_lea.sflag [#allocation6], %s160
          %s162 = sand.u32 %s28, 1
          %s163 = smul.addr %s162, 32
          %s164 = scalar_lea.vmem [#allocation5], %s163
          %s165 = smul.u32 4, %s18
          %s167 = ssub.s32 512, 512
          %168 = vsyncadd %s161, %s167
          %s169 = smul.addr %s165, 128
          %s170 = scalar_lea.hbm %s0, %s169
          %s171 = sshll.u32 %s164, 4
          %s172 = int_to_ptr.vmem [resolvable:$true] %s171
          %177 = dma.hbm_to_vmem [thread:$0]  %s170, 512, %s172, %s161, 128, 128, 8
        $region20: #{tpu_custom_call.1} parent=15 // pred_fallthru
          _
        // Predicated region
        $region21: #{tpu_custom_call.1} parent=15 // pred_check
          %p178 = pneg %p64
        $region22: #{tpu_custom_call.1} parent=15 // pred_check_branch
          %180 = sbr.rel (%p178) target = $region24
        $region23: #{tpu_custom_call.1} parent=15 // pred_region
          %s181 = sand.u32 %s18, 1
          %s182 = scalar_lea.sflag [#allocation9], %s181
          %s183 = sand.u32 %s54, 1
          %s184 = smul.addr %s183, 16
          %s185 = scalar_lea.vmem [#allocation8], %s184
          %s186 = smul.u32 4, %s18
          %s188 = ssub.s32 256, 256
          %189 = vsyncadd %s182, %s188
          %s190 = smul.addr %s186, 64
          %s191 = scalar_lea.hbm %s1, %s190
          %s192 = sshll.u32 %s185, 4
          %s193 = int_to_ptr.vmem [resolvable:$true] %s192
          %198 = dma.hbm_to_vmem [thread:$0]  %s191, 256, %s193, %s182, 64, 64, 4
        $region24: #{tpu_custom_call.1} parent=15 // pred_fallthru
          _
        // Predicated region
        $region25: #{tpu_custom_call.1} parent=15 // pred_check
          %p199 = pneg %p90
        $region26: #{tpu_custom_call.1} parent=15 // pred_check_branch
          %201 = sbr.rel (%p199) target = $region28
        $region27: #{tpu_custom_call.1} parent=15 // pred_region
          %s202 = sand.u32 %s18, 1
          %s203 = scalar_lea.sflag [#allocation9], %s202
          %s204 = sand.u32 %s80, 1
          %s205 = smul.addr %s204, 8
          %s206 = scalar_lea.vmem [#allocation10], %s205
          %s208 = ssub.s32 128, 128
          %209 = vsyncadd %s203, %s208
          %s210 = smul.addr %s18, 128
          %s211 = scalar_lea.hbm %s2, %s210
          %s213 = sshll.u32 %s206, 4
          %s214 = int_to_ptr.vmem [resolvable:$true] %s213
          %216 = dma.hbm_to_vmem [thread:$0]  %s211, 128, %s214, %s203
        $region28: #{tpu_custom_call.1} parent=15 // pred_fallthru
          _
      $region16: #{tpu_custom_call.1} parent=5 // pred_fallthru
        _
      %p217 = scmp.le.s32.totalorder 1, %s18
      %p218 = scmp.lt.s32.totalorder %s18, 4
      %p219 = pnand %p217, %p218
      %p220 = pneg %p219
      // Predicated region
      $region29: #{tpu_custom_call.1} parent=5 // pred_check
        _
      $region30: #{tpu_custom_call.1} parent=5 // pred_check_branch
        %222 = sbr.rel (%p219) target = $region32
      $region31: #{tpu_custom_call.1} parent=5 // pred_region
        %s223 = ssub.s32 %s18, 1
        %s224 = sand.u32 %s31, 1
        %s225 = scalar_lea.sflag [#allocation6], %s224
        %s226 = sand.u32 %s31, 1
        %s227 = smul.addr %s226, 32
        %s228 = scalar_lea.vmem [#allocation5], %s227
        // Predicated region
        $region33: #{tpu_custom_call.1} parent=31 // pred_check
          %p229 = pneg %p44
        $region34: #{tpu_custom_call.1} parent=31 // pred_check_branch
          %231 = sbr.rel (%p229) target = $region36
        $region35: #{tpu_custom_call.1} parent=31 // pred_region
          %232 = dma.done %s225, 512
        $region36: #{tpu_custom_call.1} parent=31 // pred_fallthru
          _
        %s233 = sand.u32 %s23, 1
        %s234 = scalar_lea.sflag [#allocation9], %s233
        %s235 = sand.u32 %s57, 1
        %s236 = smul.addr %s235, 16
        %s237 = scalar_lea.vmem [#allocation8], %s236
        // Predicated region
        $region37: #{tpu_custom_call.1} parent=31 // pred_check
          %p238 = pneg %p70
        $region38: #{tpu_custom_call.1} parent=31 // pred_check_branch
          %240 = sbr.rel (%p238) target = $region40
        $region39: #{tpu_custom_call.1} parent=31 // pred_region
          %241 = dma.done %s234, 256
        $region40: #{tpu_custom_call.1} parent=31 // pred_fallthru
          _
        %s242 = sand.u32 %s23, 1
        %s243 = scalar_lea.sflag [#allocation9], %s242
        %s244 = sand.u32 %s83, 1
        %s245 = smul.addr %s244, 8
        %s246 = scalar_lea.vmem [#allocation10], %s245
        // Predicated region
        $region41: #{tpu_custom_call.1} parent=31 // pred_check
          %p247 = pneg %p96
        $region42: #{tpu_custom_call.1} parent=31 // pred_check_branch
          %249 = sbr.rel (%p247) target = $region44
        $region43: #{tpu_custom_call.1} parent=31 // pred_region
          %250 = dma.done %s243, 128
        $region44: #{tpu_custom_call.1} parent=31 // pred_fallthru
          _
        %s251 = sand.u32 %s31, 1
        %s252 = scalar_lea.sflag [#allocation6], %s251
        %s253 = sand.u32 %s31, 1
        %s254 = smul.addr %s253, 32
        %s255 = scalar_lea.vmem [#allocation5], %s254
        %p256 = pneg %p44
        %p257 = pneg %p41
        %s258 = sand.u32 %s23, 1
        %s259 = scalar_lea.sflag [#allocation9], %s258
        %s260 = sand.u32 %s57, 1
        %s261 = smul.addr %s260, 16
        %s262 = scalar_lea.vmem [#allocation8], %s261
        %p263 = pneg %p70
        %p264 = pneg %p67
        %s265 = sand.u32 %s23, 1
        %s266 = scalar_lea.sflag [#allocation9], %s265
        %s267 = sand.u32 %s83, 1
        %s268 = smul.addr %s267, 8
        %s269 = scalar_lea.vmem [#allocation10], %s268
        %p270 = pneg %p96
        %p271 = pneg %p93
        %p272 = pneg %p117
        %p273 = pneg %p114
        %p274 = pneg %p138
        %p275 = pneg %p135
        %s276 = smul.u32 4, %s23
        %s277 = smul.u32 4, %s23
        %p278 = scmp.eq.s32.totalorder %s23, 0
        // Predicated region
        $region45: #{tpu_custom_call.1} parent=31 // pred_check
          %p279 = pneg %p278
        $region46: #{tpu_custom_call.1} parent=31 // pred_check_branch
          %281 = sbr.rel (%p279) target = $region48
        $region47: #{tpu_custom_call.1} parent=31 // pred_region
          %282 = vst [vmem:[#allocation2] sm:$0x1] 0.0
          %283 = vst [vmem:[#allocation3] sm:$0xf] 0.0
          %284 = vst [vmem:[#allocation4] sm:$0xf] 0.0
        $region48: #{tpu_custom_call.1} parent=31 // pred_fallthru
          _
        %v285 = vld [vmem:[%s228] sm:$0xff]
        %v286 = vld [vmem:[%s228 + $0x8] sm:$0xff]
        %v287 = vld [vmem:[%s228 + $0x10] sm:$0xff]
        %v288 = vld [vmem:[%s228 + $0x18] sm:$0xff]
        %v289 = vld [vmem:[%s237] sm:$0xf]
        %v290 = vld [vmem:[%s237 + $0x4] sm:$0xf]
        %v291 = vld [vmem:[%s237 + $0x8] sm:$0xf]
        %v292 = vld [vmem:[%s237 + $0xc] sm:$0xf]
        %v293 = vunpack.c.l.bf16 %v289
        %v294 = vunpack.c.l.bf16 %v290
        %v295 = vunpack.c.l.bf16 %v291
        %v296 = vunpack.c.l.bf16 %v292
        %v297 = vld [vmem:[%s246] sm:$0xff]
        %v298 = vunpack.c.0.s8 %v297
        %v299 = vunpack.c.1.s8 %v297
        %v300 = vunpack.c.2.s8 %v297
        %v301 = vunpack.c.3.s8 %v297
        %vm302 = vcmp.ge.s32.totalorder %v298, 0
        %vm303 = vcmp.ge.s32.totalorder %v299, 0
        %vm304 = vcmp.ge.s32.totalorder %v300, 0
        %vm305 = vcmp.ge.s32.totalorder %v301, 0
        %v306 = vsel %vm302, 1, 0
        %v307 = vsel %vm303, 1, 0
        %v308 = vsel %vm304, 1, 0
        %v309 = vsel %vm305, 1, 0
        %v310 = vcvt.s32.f32 %v306
        %v311 = vcvt.s32.f32 %v307
        %v312 = vcvt.s32.f32 %v308
        %v313 = vcvt.s32.f32 %v309
        %v314 = vmax.f32 %v285, 0.0
        %v315 = vmax.f32 %v286, 0.0
        %v316 = vmax.f32 %v287, 0.0
        %v317 = vmax.f32 %v288, 0.0
        %v318 = vmul.f32 %v285, %v293
        %v319 = vmul.f32 %v286, %v294
        %v320 = vmul.f32 %v287, %v295
        %v321 = vmul.f32 %v288, %v296
        %v322 = vsub.f32 %v314, %v318
        %v323 = vsub.f32 %v315, %v319
        %v324 = vsub.f32 %v316, %v320
        %v325 = vsub.f32 %v317, %v321
        %v326 = vand.u32 2147483647, %v285
        %v327 = vand.u32 2147483647, %v286
        %v328 = vand.u32 2147483647, %v287
        %v329 = vand.u32 2147483647, %v288
        %v330 = vsub.f32 0.0, %v326
        %v331 = vsub.f32 0.0, %v327
        %v332 = vsub.f32 0.0, %v328
        %v333 = vsub.f32 0.0, %v329
        %v334 = vmul.f32 %v330, 1.442695
        %v335 = vpow.pop %v334
        %v336 = vmul.f32 %v331, 1.442695
        %v337 = vpow.pop %v336
        %v338 = vmul.f32 %v332, 1.442695
        %v339 = vpow.pop %v338
        %v340 = vmul.f32 %v333, 1.442695
        %v341 = vpow.pop %v340
        %v342 = vadd.f32 %v335, 1.0
        %v343 = vlog2.pop %v342
        %v344 = vmul.f32 %v343, 0.6931472
        %v345 = vmul.f32 -0.5, %v335
        %v346 = vadd.f32 %v345, 1.0
        %v347 = vmul.f32 %v346, %v335
        %v348 = vand.u32 2147483647, %v335
        %vm349 = vcmp.lt.f32.partialorder %v348, 0.0004427343
        %v350 = vsel %vm349, %v347, %v344
        %v351 = vadd.f32 %v337, 1.0
        %v352 = vlog2.pop %v351
        %v353 = vmul.f32 %v352, 0.6931472
        %v354 = vmul.f32 -0.5, %v337
        %v355 = vadd.f32 %v354, 1.0
        %v356 = vmul.f32 %v355, %v337
        %v357 = vand.u32 2147483647, %v337
        %vm358 = vcmp.lt.f32.partialorder %v357, 0.0004427343
        %v359 = vsel %vm358, %v356, %v353
        %v360 = vadd.f32 %v339, 1.0
        %v361 = vlog2.pop %v360
        %v362 = vmul.f32 %v361, 0.6931472
        %v363 = vmul.f32 -0.5, %v339
        %v364 = vadd.f32 %v363, 1.0
        %v365 = vmul.f32 %v364, %v339
        %v366 = vand.u32 2147483647, %v339
        %vm367 = vcmp.lt.f32.partialorder %v366, 0.0004427343
        %v368 = vsel %vm367, %v365, %v362
        %v369 = vadd.f32 %v341, 1.0
        %v370 = vlog2.pop %v369
        %v371 = vmul.f32 %v370, 0.6931472
        %v372 = vmul.f32 -0.5, %v341
        %v373 = vadd.f32 %v372, 1.0
        %v374 = vmul.f32 %v373, %v341
        %v375 = vand.u32 2147483647, %v341
        %vm376 = vcmp.lt.f32.partialorder %v375, 0.0004427343
        %v377 = vsel %vm376, %v374, %v371
        %v378 = vadd.f32 %v322, %v350
        %v379 = vadd.f32 %v323, %v359
        %v380 = vadd.f32 %v324, %v368
        %v381 = vadd.f32 %v325, %v377
        %v382 = vmul.f32 %v378, %v310
        %v383 = vmul.f32 %v379, %v311
        %v384 = vmul.f32 %v380, %v312
        %v385 = vmul.f32 %v381, %v313
        %v386 = vld [vmem:[#allocation2] sm:$0x1]
        %v387 = vadd.f32 %v382, %v383
        %v388 = vadd.f32 %v387, %v384
        %v389 = vadd.f32 %v388, %v385
        %v390 = vrot.slane %v389, 4
        %v391 = vadd.f32 %v389, %v390
        %v392 = vrot.slane %v391, 2
        %v393 = vadd.f32 %v391, %v392
        %v394 = vrot.slane %v393, 1
        %v395 = vadd.f32 %v393, %v394
        %v396 = vadd.f32 %v386, %v395
        %397 = vst [vmem:[#allocation2] sm:$0x1] %v396
        %vm398 = vcmp.gt.f32.partialorder %v285, 0.0
        %vm399 = vcmp.gt.f32.partialorder %v286, 0.0
        %vm400 = vcmp.gt.f32.partialorder %v287, 0.0
        %vm401 = vcmp.gt.f32.partialorder %v288, 0.0
        %vm402 = vcmp.gt.f32.partialorder %v293, 0.5
        %vm403 = vcmp.gt.f32.partialorder %v294, 0.5
        %vm404 = vcmp.gt.f32.partialorder %v295, 0.5
        %vm405 = vcmp.gt.f32.partialorder %v296, 0.5
        %vm406 = vmxor %vm398, %vm402
        %vm407 = vmxor %vm399, %vm403
        %vm408 = vmxor %vm400, %vm404
        %vm409 = vmxor %vm401, %vm405
        %vm410 = vmxor %vm406, 1
        %vm411 = vmxor %vm407, 1
        %vm412 = vmxor %vm408, 1
        %vm413 = vmxor %vm409, 1
        %v414 = vsel %vm410, 1, 0
        %v415 = vsel %vm411, 1, 0
        %v416 = vsel %vm412, 1, 0
        %v417 = vsel %vm413, 1, 0
        %v418 = vcvt.s32.f32 %v414
        %v419 = vcvt.s32.f32 %v415
        %v420 = vcvt.s32.f32 %v416
        %v421 = vcvt.s32.f32 %v417
        %vm422 = vcmp.eq.s32.totalorder %v298, 0
        %vm423 = vcmp.eq.s32.totalorder %v299, 0
        %vm424 = vcmp.eq.s32.totalorder %v300, 0
        %vm425 = vcmp.eq.s32.totalorder %v301, 0
        %v426 = vsel %vm422, 1, 0
        %v427 = vsel %vm423, 1, 0
        %v428 = vsel %vm424, 1, 0
        %v429 = vsel %vm425, 1, 0
        %v430 = vcvt.s32.f32 %v426
        %v431 = vcvt.s32.f32 %v427
        %v432 = vcvt.s32.f32 %v428
        %v433 = vcvt.s32.f32 %v429
        %v434 = vld [vmem:[#allocation4] sm:$0x1]
        %v435 = vadd.f32 %v430, %v431
        %v436 = vadd.f32 %v435, %v432
        %v437 = vadd.f32 %v436, %v433
        %v438 = vrot.slane %v437, 4
        %v439 = vadd.f32 %v437, %v438
        %v440 = vrot.slane %v439, 2
        %v441 = vadd.f32 %v439, %v440
        %v442 = vrot.slane %v441, 1
        %v443 = vadd.f32 %v441, %v442
        %v444 = vadd.f32 %v434, %v443
        %445 = vst [vmem:[#allocation4] sm:$0x1] %v444
        %v446 = vld [vmem:[#allocation3] sm:$0x1]
        %v447 = vmul.f32 %v418, %v430
        %v448 = vmul.f32 %v419, %v431
        %v449 = vmul.f32 %v420, %v432
        %v450 = vmul.f32 %v421, %v433
        %v451 = vadd.f32 %v447, %v448
        %v452 = vadd.f32 %v451, %v449
        %v453 = vadd.f32 %v452, %v450
        %v454 = vrot.slane %v453, 4
        %v455 = vadd.f32 %v453, %v454
        %v456 = vrot.slane %v455, 2
        %v457 = vadd.f32 %v455, %v456
        %v458 = vrot.slane %v457, 1
        %v459 = vadd.f32 %v457, %v458
        %v460 = vadd.f32 %v446, %v459
        %461 = vst [vmem:[#allocation3] sm:$0x1] %v460
        %vm462 = vcmp.eq.s32.totalorder %v298, 1
        %vm463 = vcmp.eq.s32.totalorder %v299, 1
        %vm464 = vcmp.eq.s32.totalorder %v300, 1
        %vm465 = vcmp.eq.s32.totalorder %v301, 1
        %v466 = vsel %vm462, 1, 0
        %v467 = vsel %vm463, 1, 0
        %v468 = vsel %vm464, 1, 0
        %v469 = vsel %vm465, 1, 0
        %v470 = vcvt.s32.f32 %v466
        %v471 = vcvt.s32.f32 %v467
        %v472 = vcvt.s32.f32 %v468
        %v473 = vcvt.s32.f32 %v469
        %v474 = vld [vmem:[#allocation4 + $0x1] sm:$0x1]
        %v475 = vadd.f32 %v470, %v471
        %v476 = vadd.f32 %v475, %v472
        %v477 = vadd.f32 %v476, %v473
        %v478 = vrot.slane %v477, 4
        %v479 = vadd.f32 %v477, %v478
        %v480 = vrot.slane %v479, 2
        %v481 = vadd.f32 %v479, %v480
        %v482 = vrot.slane %v481, 1
        %v483 = vadd.f32 %v481, %v482
        %v484 = vadd.f32 %v474, %v483
        %485 = vst [vmem:[#allocation4 + $0x1] sm:$0x1] %v484
        %v486 = vld [vmem:[#allocation3 + $0x1] sm:$0x1]
        %v487 = vmul.f32 %v418, %v470
        %v488 = vmul.f32 %v419, %v471
        %v489 = vmul.f32 %v420, %v472
        %v490 = vmul.f32 %v421, %v473
        %v491 = vadd.f32 %v487, %v488
        %v492 = vadd.f32 %v491, %v489
        %v493 = vadd.f32 %v492, %v490
        %v494 = vrot.slane %v493, 4
        %v495 = vadd.f32 %v493, %v494
        %v496 = vrot.slane %v495, 2
        %v497 = vadd.f32 %v495, %v496
        %v498 = vrot.slane %v497, 1
        %v499 = vadd.f32 %v497, %v498
        %v500 = vadd.f32 %v486, %v499
        %501 = vst [vmem:[#allocation3 + $0x1] sm:$0x1] %v500
        %vm502 = vcmp.eq.s32.totalorder %v298, 2
        %vm503 = vcmp.eq.s32.totalorder %v299, 2
        %vm504 = vcmp.eq.s32.totalorder %v300, 2
        %vm505 = vcmp.eq.s32.totalorder %v301, 2
        %v506 = vsel %vm502, 1, 0
        %v507 = vsel %vm503, 1, 0
        %v508 = vsel %vm504, 1, 0
        %v509 = vsel %vm505, 1, 0
        %v510 = vcvt.s32.f32 %v506
        %v511 = vcvt.s32.f32 %v507
        %v512 = vcvt.s32.f32 %v508
        %v513 = vcvt.s32.f32 %v509
        %v514 = vld [vmem:[#allocation4 + $0x2] sm:$0x1]
        %v515 = vadd.f32 %v510, %v511
        %v516 = vadd.f32 %v515, %v512
        %v517 = vadd.f32 %v516, %v513
        %v518 = vrot.slane %v517, 4
        %v519 = vadd.f32 %v517, %v518
        %v520 = vrot.slane %v519, 2
        %v521 = vadd.f32 %v519, %v520
        %v522 = vrot.slane %v521, 1
        %v523 = vadd.f32 %v521, %v522
        %v524 = vadd.f32 %v514, %v523
        %525 = vst [vmem:[#allocation4 + $0x2] sm:$0x1] %v524
        %v526 = vld [vmem:[#allocation3 + $0x2] sm:$0x1]
        %v527 = vmul.f32 %v418, %v510
        %v528 = vmul.f32 %v419, %v511
        %v529 = vmul.f32 %v420, %v512
        %v530 = vmul.f32 %v421, %v513
        %v531 = vadd.f32 %v527, %v528
        %v532 = vadd.f32 %v531, %v529
        %v533 = vadd.f32 %v532, %v530
        %v534 = vrot.slane %v533, 4
        %v535 = vadd.f32 %v533, %v534
        %v536 = vrot.slane %v535, 2
        %v537 = vadd.f32 %v535, %v536
        %v538 = vrot.slane %v537, 1
        %v539 = vadd.f32 %v537, %v538
        %v540 = vadd.f32 %v526, %v539
        %541 = vst [vmem:[#allocation3 + $0x2] sm:$0x1] %v540
        %vm542 = vcmp.eq.s32.totalorder %v298, 3
        %vm543 = vcmp.eq.s32.totalorder %v299, 3
        %vm544 = vcmp.eq.s32.totalorder %v300, 3
        %vm545 = vcmp.eq.s32.totalorder %v301, 3
        %v546 = vsel %vm542, 1, 0
        %v547 = vsel %vm543, 1, 0
        %v548 = vsel %vm544, 1, 0
        %v549 = vsel %vm545, 1, 0
        %v550 = vcvt.s32.f32 %v546
        %v551 = vcvt.s32.f32 %v547
        %v552 = vcvt.s32.f32 %v548
        %v553 = vcvt.s32.f32 %v549
        %v554 = vld [vmem:[#allocation4 + $0x3] sm:$0x1]
        %v555 = vadd.f32 %v550, %v551
        %v556 = vadd.f32 %v555, %v552
        %v557 = vadd.f32 %v556, %v553
        %v558 = vrot.slane %v557, 4
        %v559 = vadd.f32 %v557, %v558
        %v560 = vrot.slane %v559, 2
        %v561 = vadd.f32 %v559, %v560
        %v562 = vrot.slane %v561, 1
        %v563 = vadd.f32 %v561, %v562
        %v564 = vadd.f32 %v554, %v563
        %565 = vst [vmem:[#allocation4 + $0x3] sm:$0x1] %v564
        %v566 = vld [vmem:[#allocation3 + $0x3] sm:$0x1]
        %v567 = vmul.f32 %v418, %v550
        %v568 = vmul.f32 %v419, %v551
        %v569 = vmul.f32 %v420, %v552
        %v570 = vmul.f32 %v421, %v553
        %v571 = vadd.f32 %v567, %v568
        %v572 = vadd.f32 %v571, %v569
        %v573 = vadd.f32 %v572, %v570
        %v574 = vrot.slane %v573, 4
        %v575 = vadd.f32 %v573, %v574
        %v576 = vrot.slane %v575, 2
        %v577 = vadd.f32 %v575, %v576
        %v578 = vrot.slane %v577, 1
        %v579 = vadd.f32 %v577, %v578
        %v580 = vadd.f32 %v566, %v579
        %581 = vst [vmem:[#allocation3 + $0x3] sm:$0x1] %v580
        %p582 = scmp.eq.s32.totalorder %s23, 2
        // Predicated region
        $region49: #{tpu_custom_call.1} parent=31 // pred_check
          %p583 = pneg %p582
        $region50: #{tpu_custom_call.1} parent=31 // pred_check_branch
          %585 = sbr.rel (%p583) target = $region52
        $region51: #{tpu_custom_call.1} parent=31 // pred_region
          %v586 = vld [vmem:[#allocation2] sm:$0x1]
          %vm587 = vcmask 1040384
          %v588 = vsel %vm587, %v586, 0.0
          %589 = vadd.xlane.f32.xlu0 %v588
          %v590 = vpop.xlane.xlu0 %589
          %v591 = vmul.f32 %v590, 0.0001
          %vm592 = vcmask 0
          %593 = vst.msk [vmem:[#allocation11] sm:$0x1] %vm592, %v591
          %v594 = vld [vmem:[#allocation3] sm:$0xf]
          %vm595 = vcmask 1043456
          %v596 = vsel %vm595, %v594, 0.0
          %597 = vadd.xlane.f32.xlu0 %v596
          %v598 = vpop.xlane.xlu0 %597
          %v599 = vld [vmem:[#allocation4] sm:$0xf]
          %v600 = vsel %vm595, %v599, 0.0
          %601 = vadd.xlane.f32.xlu0 %v600
          %v602 = vpop.xlane.xlu0 %601
          %v603 = vmax.f32 %v602, 1.0
          %v604 = vrcp.pop %v603
          %v605 = vmul.f32 %v598, %v604
          %vm606 = vcmask 3072
          %607 = vst.msk [vmem:[%s4] sm:$0xf] %vm606, %v605
        $region52: #{tpu_custom_call.1} parent=31 // pred_fallthru
          _
        // Predicated region
        $region53: #{tpu_custom_call.1} parent=31 // pred_check
          %p608 = pneg %p114
        $region54: #{tpu_custom_call.1} parent=31 // pred_check_branch
          %610 = sbr.rel (%p608) target = $region56
        $region55: #{tpu_custom_call.1} parent=31 // pred_region
          %s612 = ssub.s32 16, 16
          %613 = vsyncadd [#allocation7], %s612
          %s615 = sshll.u32 [#allocation11], 4
          %s616 = int_to_ptr.vmem [resolvable:$true] %s615
          %618 = dma.vmem_to_hbm [thread:$0]  %s616, 16, %s3, [#allocation7]
        $region56: #{tpu_custom_call.1} parent=31 // pred_fallthru
          _
        // Predicated region
        $region57: #{tpu_custom_call.1} parent=31 // pred_check
          %p619 = pneg %p135
        $region58: #{tpu_custom_call.1} parent=31 // pred_check_branch
          %621 = sbr.rel (%p619) target = $region60
        $region59: #{tpu_custom_call.1} parent=31 // pred_region
          _
        $region60: #{tpu_custom_call.1} parent=31 // pred_fallthru
          _
        // Predicated region
        $region61: #{tpu_custom_call.1} parent=31 // pred_check
          %p622 = pneg %p114
        $region62: #{tpu_custom_call.1} parent=31 // pred_check_branch
          %624 = sbr.rel (%p622) target = $region64
        $region63: #{tpu_custom_call.1} parent=31 // pred_region
          %625 = dma.done [#allocation7], 16
        $region64: #{tpu_custom_call.1} parent=31 // pred_fallthru
          _
        // Predicated region
        $region65: #{tpu_custom_call.1} parent=31 // pred_check
          %p626 = pneg %p135
        $region66: #{tpu_custom_call.1} parent=31 // pred_check_branch
          %628 = sbr.rel (%p626) target = $region68
        $region67: #{tpu_custom_call.1} parent=31 // pred_region
          _
        $region68: #{tpu_custom_call.1} parent=31 // pred_fallthru
          _
      $region32: #{tpu_custom_call.1} parent=5 // pred_fallthru
        _
      %p629 = scmp.le.s32.totalorder 2, %s18
      // Predicated region
      $region69: #{tpu_custom_call.1} parent=5 // pred_check
        %p630 = pneg %p629
      $region70: #{tpu_custom_call.1} parent=5 // pred_check_branch
        %632 = sbr.rel (%p630) target = $region72
      $region71: #{tpu_custom_call.1} parent=5 // pred_region
        %s633 = ssub.s32 %s18, 2
      $region72: #{tpu_custom_call.1} parent=5 // pred_fallthru
        _
    $region6: #{tpu_custom_call.1} parent=1 // loop_footer
      %s22 = sadd.s32 1, %s18
    $region7: #{tpu_custom_call.1} parent=1 // loop_footer_branch
      %17 = sbr.rel target = $region3
    $region8: #{tpu_custom_call.1} parent=1 // loop_exit
      _
    %634 = vsyncpa [#allocation6], 1
    %s635 = scalar_lea.sflag [#allocation6], 1
    %636 = vsyncpa %s635, 1
    %637 = vsyncpa [#allocation9], 1
    %s638 = scalar_lea.sflag [#allocation9], 1
    %639 = vsyncpa %s638, 1
    %640 = vsyncpa [#allocation7], 1
    %s641 = scalar_lea.sflag [#allocation7], 1
    %642 = vsyncpa %s641, 1

</llo_original>
